<compile_context>
chip_gen: v7x
topology: tpu7x:2x2x1
jax: 0.10.0
libtpu: 0.0.40
codegen_flags: <defaults>
</compile_context>

<pallas_src>
import math

import jax
import jax.numpy as jnp
from jax.experimental import pallas as pl
from jax.experimental.pallas import tpu as pltpu


def _round_up(n, m):
    return ((n + m - 1) // m) * m


def _sinusoidal_kernel(x_ref, table_ref, out_ref):
    # x_ref:     (Bt, 1) or (Bt, W)  timestep values (lane-expanded when packed)
    # table_ref: (2, W)              row 0 = freqs, row 1 = phase (0 / pi/2)
    # out_ref:   (Bt, W)
    freqs = table_ref[0:1, :]                     # (1, W)
    phase = table_ref[1:2, :]                     # (1, W)
    # cos(t) == sin(t + pi/2): single transcendental pass over the full width.
    emb = x_ref[...] * freqs + phase              # f32 VPU broadcast multiply/add
    out_ref[...] = jnp.sin(emb).astype(out_ref.dtype)


def sinusoidal_pos_emb(x, dim, *, block_rows=1024, out_dtype=jnp.float32):
    """Pallas SinusoidalPosEmb forward. x: (B,) timesteps -> (B, dim)."""
    assert dim % 2 == 0 and dim >= 4, "dim must be even and >= 4"
    B = x.shape[0]
    half = dim // 2

    # Constant tables (hoisted out of the kernel).
    emb_scale = math.log(10000.0) / (half - 1)
    freqs = jnp.exp(jnp.arange(half, dtype=jnp.float32) * -emb_scale)
    freqs_row = jnp.concatenate([freqs, freqs])                         # (dim,)
    phase_row = jnp.concatenate(
        [jnp.zeros((half,), jnp.float32),
         jnp.full((half,), jnp.pi / 2, jnp.float32)])                   # (dim,)

    # Lane-dense packing for narrow dims: g batch rows per 128-lane output row.
    g = (128 // dim) if (dim < 128 and 128 % dim == 0) else 1
    W = g * dim

    # Pad B only to a multiple of g (<= g-1 extra rows; zero when g == 1).
    Bp = _round_up(B, g)
    x_f32 = x.astype(jnp.float32).reshape(-1)
    if Bp != B:
        x_f32 = jnp.pad(x_f32, (0, Bp - B))
    R = Bp // g                                   # packed row count

    if g == 1:
        x_in = x_f32.reshape(R, 1)                # kernel broadcasts along lanes
    else:
        # Wrapper-side layout plumbing: each timestep repeated across its
        # dim-wide lane group so the kernel store is a full 128-lane vst.
        x_in = jnp.repeat(x_f32, dim).reshape(R, W)

    table = jnp.stack([jnp.tile(freqs_row, g), jnp.tile(phase_row, g)])  # (2, W)

    # Row tile: big to amortize per-grid-step overhead, multiple of 8 when
    # multiple blocks are needed, and clamped so 2x (double-buffered) output
    # tiles stay <= ~16 MiB (safe under the v7x scoped-VMEM limit too).
    vmem_cap_rows = max(8, ((16 * 1024 * 1024) // (2 * W * 4)) // 8 * 8)
    Bt = min(_round_up(block_rows, 8), vmem_cap_rows)
    if R <= Bt:
        Bt = R                                    # single block == full array
    grid = (pl.cdiv(R, Bt),)                      # ragged last block is clipped

    out = pl.pallas_call(
        _sinusoidal_kernel,
        out_shape=jax.ShapeDtypeStruct((R, W), out_dtype),
        grid=grid,
        in_specs=[
            pl.BlockSpec((Bt, x_in.shape[1]), lambda i: (i, 0)),  # timesteps
            pl.BlockSpec((2, W), lambda i: (0, 0)),               # const table
        ],
        out_specs=pl.BlockSpec((Bt, W), lambda i: (i, 0)),
        compiler_params=pltpu.CompilerParams(
            dimension_semantics=("parallel",)),
    )(x_in, table)

    out = out.reshape(Bp, dim)        # contiguous unpack (free) when g > 1
    if Bp != B:
        out = out[:B]
    return out


# ------------------------- pure-JAX reference -------------------------
def _reference(x, dim):
    half = dim // 2
    emb_scale = math.log(10000.0) / (half - 1)
    freqs = jnp.exp(jnp.arange(half, dtype=jnp.float32) * -emb_scale)
    emb = x.astype(jnp.float32)[:, None] * freqs[None, :]
    return jnp.concatenate([jnp.sin(emb), jnp.cos(emb)], axis=-1)


if __name__ == "__main__":
    key = jax.random.PRNGKey(0)

    # Case 1: narrow dim (exercises the lane-dense packed path, g = 4).
    B1, dim1 = 8, 32
    x1 = jax.random.uniform(key, (B1,), jnp.float32, minval=0.0, maxval=1000.0)
    out1 = jax.block_until_ready(sinusoidal_pos_emb(x1, dim1))
    assert out1.shape == (B1, dim1)
    # Note: sin(t + pi/2) vs cos(t) differs only at ulp level of the f32
    # argument (<~5e-5 for t up to ~1000), well inside this tolerance.
    err1 = float(jnp.max(jnp.abs(out1 - _reference(x1, dim1))))
    assert err1 < 5e-4, f"dim=32 max abs error vs reference: {err1}"

    # Case 2: lane-width >= 128 path (g = 1), non-multiple-of-8 batch.
    B2, dim2 = 20, 128
    x2 = jax.random.uniform(jax.random.PRNGKey(1), (B2,), jnp.float32,
                            minval=0.0, maxval=1000.0)
    out2 = jax.block_until_ready(sinusoidal_pos_emb(x2, dim2))
    assert out2.shape == (B2, dim2)
    err2 = float(jnp.max(jnp.abs(out2 - _reference(x2, dim2))))
    assert err2 < 5e-4, f"dim=128 max abs error vs reference: {err2}"

    print("KERNEL_OK")
</pallas_src>

<mosaic_0001>
module attributes {stable_mosaic.version = 11 : i64} {
  func.func @_sinusoidal_kernel(%arg0: i32, %arg1: memref<2x128xf32, #tpu.memory_space<vmem>>, %arg2: memref<2x128xf32, #tpu.memory_space<vmem>>, %arg3: memref<2x128xf32, #tpu.memory_space<vmem>>) attributes {dimension_semantics = [#tpu.dimension_semantics<parallel>], iteration_bounds = array<i64: 1>, scalar_prefetch = 0 : i64, scratch_operands = 0 : i64, tpu.core_type = #tpu.core_type<tc>, window_params = [{transform_indices = @transform_0, window_bounds = array<i64: 2, 128>}, {pipeline_mode = #tpu.pipeline_mode<synchronous>, transform_indices = @transform_1, window_bounds = array<i64: 2, 128>}, {transform_indices = @transform_2, window_bounds = array<i64: 2, 128>}]} {
    %c0 = arith.constant 0 : index
    %c0_0 = arith.constant 0 : index
    %0 = vector.load %arg2[%c0, %c0_0] : memref<2x128xf32, #tpu.memory_space<vmem>>, vector<1x128xf32>
    %c1 = arith.constant 1 : index
    %c0_1 = arith.constant 0 : index
    %1 = vector.load %arg2[%c1, %c0_1] : memref<2x128xf32, #tpu.memory_space<vmem>>, vector<1x128xf32>
    %c0_2 = arith.constant 0 : index
    %c0_3 = arith.constant 0 : index
    %2 = vector.load %arg1[%c0_2, %c0_3] : memref<2x128xf32, #tpu.memory_space<vmem>>, vector<2x128xf32>
    %3 = vector.broadcast %0 : vector<1x128xf32> to vector<2x128xf32>
    %4 = arith.mulf %2, %3 : vector<2x128xf32>
    %5 = vector.broadcast %1 : vector<1x128xf32> to vector<2x128xf32>
    %6 = arith.addf %4, %5 : vector<2x128xf32>
    %7 = math.sin %6 : vector<2x128xf32>
    %c0_4 = arith.constant 0 : index
    %c0_5 = arith.constant 0 : index
    %8 = vector.load %arg3[%c0_4, %c0_5] : memref<2x128xf32, #tpu.memory_space<vmem>>, vector<2x128xf32>
    tpu.vector_store %arg3[%c0_4, %c0_5], %7 {strides = array<i32>} : memref<2x128xf32, #tpu.memory_space<vmem>>, vector<2x128xf32>,
    return
  }
  func.func @transform_0(%arg0: i32) -> (i32, i32) {
    %c0_i32 = arith.constant 0 : i32
    %c0_i32_0 = arith.constant 0 : i32
    return %arg0, %c0_i32 : i32, i32
  }
  func.func @transform_1(%arg0: i32) -> (i32, i32) {
    %c0_i32 = arith.constant 0 : i32
    %c0_i32_0 = arith.constant 0 : i32
    %c0_i32_1 = arith.constant 0 : i32
    return %c0_i32, %c0_i32_0 : i32, i32
  }
  func.func @transform_2(%arg0: i32) -> (i32, i32) {
    %c0_i32 = arith.constant 0 : i32
    %c0_i32_0 = arith.constant 0 : i32
    return %arg0, %c0_i32 : i32, i32
  }
}

</mosaic_0001>

<llo_original>
// kernel: tpu_custom_call.1
$region0: #{tpu_custom_call.1}
  #allocation0 [shape = 'u32[]', space=smem, size = 0x4, offset = 0x4, fixed_abs, tag = 'smem constant byte address 0x4 - core index']
  #allocation1 [shape = 'u32[144,128]{1,0:T(1,128)}', space=vmem, size = 0x12000, scoped, tag = 'internal scratch']
  %s0 = inlined_call_operand.hbm [shape: f32[2,128], index: 0, kind: input, shape index: {}]
  %s1 = inlined_call_operand.vmem [shape: f32[2,128], index: 1, kind: input, shape index: {}]
  %s2 = inlined_call_operand.hbm [shape: f32[2,128], index: 2, kind: output, shape index: {}]
  %s3 = sld [smem:[#allocation0]]
  $region22: #{tpu_custom_call.1} parent=0
    _
  %s5 = ssub.s32 1, %s3
  %s6 = scalar_select 0, %s5, %s3
  $region1: #{tpu_custom_call.1} parent=0
    #allocation2 [shape = 'u8[1024]{0}', space=vmem, size = 0x400, scoped, tag = 'input window, operand 0, single buffered']
    #allocation3 [shape = 's32[1]{0}', space=sflag, size = 0x4, scoped, tag = 'scoped memory for tpu_custom_call.1']
    #allocation4 [shape = 's32[1]{0}', space=sflag, size = 0x4, scoped, tag = 'scoped memory for tpu_custom_call.1']
    #allocation5 [shape = 'u8[1024]{0}', space=vmem, size = 0x400, scoped, tag = 'output window, operand 0, single buffered']
    %7 = vsyncpa [#allocation3], 0
    %8 = vsyncpa [#allocation4], 0
    // Predicated region
    $region2: #{tpu_custom_call.1} parent=1 // pred_check
      _
    $region3: #{tpu_custom_call.1} parent=1 // pred_check_branch
      %10 = sbr.rel (0) target = $region5
    $region4: #{tpu_custom_call.1} parent=1 // pred_region
      %s12 = ssub.s32 32, 32
      %13 = vsyncadd [#allocation3], %s12
      %s15 = sshll.u32 [#allocation2], 4
      %s16 = int_to_ptr.vmem [resolvable:$true] %s15
      %18 = dma.hbm_to_vmem [thread:$0]  %s0, 32, %s16, [#allocation3]
    $region5: #{tpu_custom_call.1} parent=1 // pred_fallthru
      _
    // Predicated region
    $region6: #{tpu_custom_call.1} parent=1 // pred_check
      _
    $region7: #{tpu_custom_call.1} parent=1 // pred_check_branch
      %20 = sbr.rel (0) target = $region9
    $region8: #{tpu_custom_call.1} parent=1 // pred_region
      _
    $region9: #{tpu_custom_call.1} parent=1 // pred_fallthru
      _
    // Predicated region
    $region10: #{tpu_custom_call.1} parent=1 // pred_check
      _
    $region11: #{tpu_custom_call.1} parent=1 // pred_check_branch
      %22 = sbr.rel (0) target = $region13
    $region12: #{tpu_custom_call.1} parent=1 // pred_region
      %23 = dma.done [#allocation3], 32
    $region13: #{tpu_custom_call.1} parent=1 // pred_fallthru
      _
    %v24 = vld [vmem:[%s1] sm:$0x1]
    %v25 = vld [vmem:[%s1 + $0x1] sm:$0x1]
    %v26 = vld [vmem:[#allocation2] sm:$0x3]
    %v27 = vlaneseq
    %v28 = vshrl.u32 %v27, 7
    %v29 = vsub.s32 0, %v28
    %v30 = vrot.slane %v24, %v29
    %v31 = vmul.f32 %v26, %v30
    %v32 = vlaneseq
    %v33 = vshrl.u32 %v32, 7
    %v34 = vsub.s32 0, %v33
    %v35 = vrot.slane %v25, %v34
    %v36 = vadd.f32 %v31, %v35
    %v37 = vand.u32 2147483647, %v36
    %vm38 = vcmp.le.f32.partialorder %v37, 0.7853982
    %vm39 = vcmp.lt.s32.totalorder %v36, 0
    %v40 = vand.u32 %v36, 2139095040
    %v41 = vshrl.u32 %v40, 23
    %v42 = vsub.s32 %v41, 127
    %v43 = vand.u32 2147483647, %v36
    %v44 = vand.u32 %v43, 8388607
    %v45 = vor.u32 %v44, 8388608
    %v46 = vsub.s32 0, %v45
    %v47 = vadd.s32 %v42, 1
    %vm48 = vcmp.gt.s32.totalorder %v47, 0
    %v49 = vsel %vm48, %v47, 0
    %v50 = vshrl.u32 %v49, 5
    %v51 = vand.u32 %v49, 31
    %v52 = vsub.s32 32, %v51
    %v53 = vshrl.u32 683565275, %v52
    %v54 = vshll.u32 683565275, %v51
    %v55 = vshrl.u32 2475754826, %v52
    %v56 = vor.u32 %v54, %v55
    %v57 = vshll.u32 2475754826, %v51
    %v58 = vshrl.u32 2131351028, %v52
    %v59 = vor.u32 %v57, %v58
    %v60 = vshll.u32 2131351028, %v51
    %v61 = vshrl.u32 2102212464, %v52
    %v62 = vor.u32 %v60, %v61
    %v63 = vshll.u32 2102212464, %v51
    %v64 = vshrl.u32 920167782, %v52
    %v65 = vor.u32 %v63, %v64
    %v66 = vshll.u32 920167782, %v51
    %v67 = vshrl.u32 1326507024, %v52
    %v68 = vor.u32 %v66, %v67
    %vm69 = vcmp.lt.s32.totalorder %v50, 1
    %vm70 = vcmp.lt.s32.totalorder %v50, 2
    %vm71 = vcmp.lt.s32.totalorder %v50, 3
    %vm72 = vcmp.lt.s32.totalorder %v50, 4
    %v73 = vsel %vm69, %v53, %v56
    %v74 = vsel %vm72, %v62, 2102212464
    %v75 = vsel %vm71, %v59, %v74
    %v76 = vsel %vm70, %v73, %v75
    %v77 = vsel %vm69, %v56, %v59
    %v78 = vsel %vm72, %v65, 920167782
    %v79 = vsel %vm71, %v62, %v78
    %v80 = vsel %vm70, %v77, %v79
    %v81 = vsel %vm69, %v59, %v62
    %v82 = vsel %vm72, %v68, 1326507024
    %v83 = vsel %vm71, %v65, %v82
    %v84 = vsel %vm70, %v81, %v83
    %v85 = vshll.u32 %v45, 8
    %v86 = vmul.u32.u64.compose %v85, %v84
    %v87 = vextract.low.u32 %v86
    %v88 = vextract.high.u32 %v86
    %v89 = vmul.u32.u64.compose %v85, %v80
    %v90 = vextract.low.u32 %v89
    %v91 = vextract.high.u32 %v89
    %v92 = vmul.u32 %v85, %v76
    %v93 = vadd.s32 %v88, %v90
    %vm94 = vc.u32 %v88, %v90
    %v95 = vadd.s32 %v91, 1
    %v96 = vsel %vm94, %v95, %v91
    %v97 = vadd.s32 %v92, %v96
    %v98 = vadd.s32 %v97, 536870912
    %v99 = vshrl.u32 %v98, 30
    %v100 = vshll.u32 %v99, 30
    %v101 = vsub.s32 %v97, %v100
    %vm102 = vcmp.lt.s32.totalorder %v101, 0
    %v103 = vsub.s32 0, %v101
    %v104 = vsel %vm102, %v103, %v101
    %v105 = vclz %v104
    %v106 = vsub.s32 %v105, 2
    %vm107 = vcmp.gt.s32.totalorder 0, %v106
    %v108 = vsel %vm107, 0, %v106
    %v109 = vsub.s32 32, %v108
    %v110 = vshll.u32 %v101, %v108
    %v111 = vshrl.u32 %v93, %v109
    %v112 = vor.u32 %v110, %v111
    %v113 = vsub.s32 4294967266, %v108
    %v114 = vadd.s32 %v113, 127
    %v115 = vshll.u32 %v114, 23
    %v116 = vor.u32 4788187, %v115
    %v117 = vand.u32 2147483647, %v116
    %v119 = vcvt.s32.f32 %v112
    %v120 = vmul.f32 %v119, %v117
    %v121 = vxor.u32 %v120, 2147483648
    %v122 = vsel %vm39, %v121, %v120
    %v123 = vsub.s32 4, %v99
    %v124 = vsel %vm39, %v123, %v99
    %v125 = vsel %vm38, %v36, %v122
    %v126 = vsel %vm38, 0, %v124
    %v127 = vcosq.f32.pop %v125
    %v128 = vsinq.f32.pop %v125
    %vm129 = vweird.f32 %v36
    %v130 = vadd.s32 %v126, 3
    %v131 = vand.u32 %v130, 3
    %vm132 = vcmp.lt.s32.totalorder %v131, 2
    %vm133 = vcmp.eq.s32.totalorder %v131, 0
    %v134 = vxor.u32 %v128, 2147483648
    %v135 = vsel %vm133, %v127, %v134
    %vm136 = vcmp.eq.s32.totalorder %v131, 2
    %v137 = vxor.u32 %v127, 2147483648
    %v138 = vsel %vm136, %v137, %v128
    %v139 = vsel %vm132, %v135, %v138
    %v140 = vsel %vm129, nan, %v139
    %141 = vst [vmem:[#allocation5] sm:$0x3] %v140
    // Predicated region
    $region14: #{tpu_custom_call.1} parent=1 // pred_check
      _
    $region15: #{tpu_custom_call.1} parent=1 // pred_check_branch
      %143 = sbr.rel (0) target = $region17
    $region16: #{tpu_custom_call.1} parent=1 // pred_region
      %s145 = ssub.s32 32, 32
      %146 = vsyncadd [#allocation4], %s145
      %s148 = sshll.u32 [#allocation5], 4
      %s149 = int_to_ptr.vmem [resolvable:$true] %s148
      %151 = dma.vmem_to_hbm [thread:$0]  %s149, 32, %s2, [#allocation4]
    $region17: #{tpu_custom_call.1} parent=1 // pred_fallthru
      _
    // Predicated region
    $region18: #{tpu_custom_call.1} parent=1 // pred_check
      _
    $region19: #{tpu_custom_call.1} parent=1 // pred_check_branch
      %153 = sbr.rel (0) target = $region21
    $region20: #{tpu_custom_call.1} parent=1 // pred_region
      %154 = dma.done [#allocation4], 32
    $region21: #{tpu_custom_call.1} parent=1 // pred_fallthru
      _
    %155 = vsyncpa [#allocation3], 1
    %156 = vsyncpa [#allocation4], 1

</llo_original>
